<compile_context>
chip_gen: v6e
topology: v6e:2x2x1
jax: 0.10.0
libtpu: 0.0.40
codegen_flags: <defaults>
</compile_context>

<pallas_src>
import functools
import math

import jax
import jax.numpy as jnp
from jax.experimental import pallas as pl
from jax.experimental.pallas import tpu as pltpu


# ----------------------------------------------------------------------------- helpers
def _cdiv(a: int, b: int) -> int:
    return -(-a // b)


def _round_up(x: int, m: int) -> int:
    return _cdiv(x, m) * m


def _make_pe(length: int, d_model: int) -> jnp.ndarray:
    """Sinusoidal positional-encoding table, shape [length, d_model]."""
    position = jnp.arange(length, dtype=jnp.float32)[:, None]               # [L, 1]
    div_term = jnp.exp(
        jnp.arange(0, d_model, 2, dtype=jnp.float32) * (-math.log(10000.0) / d_model)
    )                                                                       # [ceil(D/2)]
    angles = position * div_term                                            # [L, ceil(D/2)]
    pe = jnp.zeros((length, d_model), dtype=jnp.float32)
    pe = pe.at[:, 0::2].set(jnp.sin(angles))
    pe = pe.at[:, 1::2].set(jnp.cos(angles)[:, : d_model // 2])             # odd-D safe
    return pe


def _vmem_capacity_bytes() -> int:
    """Physical VMEM of the current chip; conservative (v7x) fallback."""
    try:
        info = pltpu.get_tpu_info()
        cap = getattr(info, "vmem_capacity_bytes", None)
        if cap:
            return int(cap)
    except Exception:
        pass
    return 64 * 1024 * 1024


def _choose_tiles(B: int, K: int, x_block_budget_bytes: int):
    """Pick (tb, tk, nb, nk) obeying the (8,128) rule, with balanced K tiles,
    a divides-B-friendly batch tile, and >= 4 grid steps when the data allows."""
    max_elems = max(128, x_block_budget_bytes // 4)

    # ---- batch tile: prefer full B (always legal) or a multiple of 8 dividing B.
    min_tk = K if K <= 128 else 128
    cands = [B]
    if B > 8:
        cands += [t for t in (64, 32, 16, 8) if t < B]
    feasible = [t for t in cands if t * min_tk <= max_elems] or [8 if B > 8 else B]

    def tail_waste(t):
        nb = _cdiv(B, t)
        return (nb * t - B) / float(nb * t)

    # Zero tail waste first, then larger tile (fewer grid steps).
    feasible.sort(key=lambda t: (tail_waste(t) > 0.0, -t))
    tb = feasible[0]
    nb = _cdiv(B, tb)

    # ---- lane (K) tile: largest budget-fitting width, then balanced.
    if K <= 128:
        tk, nk = K, 1
    else:
        max_tk = max(128, (min(K, max_elems // tb) // 128) * 128)
        nk = _cdiv(K, max_tk)
        tk = _round_up(_cdiv(K, nk), 128)
        nk = _cdiv(K, tk)

    # ---- give v7x's two TensorCores something to split (>= 4 grid steps),
    #      but never shrink a K tile below 512 lanes for non-tiny K.
    min_steps = 4
    if nb * nk < min_steps and K > 128:
        floor_tk = 512 if K >= 2048 else 128
        nk_target = min(_cdiv(min_steps, nb), max(1, K // floor_tk))
        if nk_target > nk:
            tk = _round_up(_cdiv(K, nk_target), 128)
            nk = _cdiv(K, tk)

    return tb, tk, nb, nk


# ----------------------------------------------------------------------------- kernel
def _pe_kernel(scale, x_ref, pe_ref, o_ref):
    # x_ref: [tb, tk] int, pe_ref: [1, tk] f32 (broadcast over rows), o_ref: [tb, tk]
    y = x_ref[...].astype(jnp.float32) * jnp.float32(scale) + pe_ref[...]
    o_ref[...] = y.astype(o_ref.dtype)


@functools.partial(
    jax.jit, static_argnames=("d_model", "max_len", "scale_input", "out_dtype"))
def positional_encoding_1d(x: jnp.ndarray,
                           *,
                           d_model: int,
                           max_len: int = 5000,
                           scale_input: bool = True,
                           out_dtype=jnp.float32) -> jnp.ndarray:
    """x: [B, S, D] int32 (LongTensor-style), batch_first=True convention."""
    B, S, D = x.shape
    assert D == d_model
    assert S <= max_len
    scale = math.sqrt(d_model) if scale_input else 1.0

    # Only the S rows we need; constant-folded under jit (S, D are static).
    pe = _make_pe(S, d_model)

    # Lane-dense 2-D presentation (free row-major reshapes under jit).
    K = S * D
    x2 = x.reshape(B, K)
    pe2 = pe.reshape(1, K)

    vmem_cap = _vmem_capacity_bytes()
    x_block_budget = min(8 << 20, max(2 << 20, vmem_cap // 8))
    tb, tk, nb, nk = _choose_tiles(B, K, x_block_budget)

    x_bytes = x.dtype.itemsize
    out_bytes = jnp.dtype(out_dtype).itemsize
    # Double-buffered VMEM footprint of one grid step (x + out + pe blocks).
    footprint = 2 * (tb * tk * x_bytes + tb * tk * out_bytes + tk * 4)
    vmem_limit = int(min(vmem_cap - (8 << 20),
                         max(32 << 20, footprint + (16 << 20))))
    vmem_limit = max(vmem_limit, footprint + (2 << 20))

    cost = pl.CostEstimate(
        flops=2 * B * K,                                          # mul + add / elem
        transcendentals=0,
        bytes_accessed=B * K * x_bytes + B * K * out_bytes + K * 4,
    )

    out2 = pl.pallas_call(
        functools.partial(_pe_kernel, scale),
        out_shape=jax.ShapeDtypeStruct((B, K), out_dtype),
        grid=(nk, nb),                              # batch innermost -> pe tile stays resident
        in_specs=[
            pl.BlockSpec((tb, tk), lambda k, b: (b, k)),    # x
            pl.BlockSpec((1, tk), lambda k, b: (0, k)),     # pe (independent of b)
        ],
        out_specs=pl.BlockSpec((tb, tk), lambda k, b: (b, k)),
        compiler_params=pltpu.CompilerParams(
            dimension_semantics=("parallel", "parallel"),
            vmem_limit_bytes=vmem_limit,
        ),
        cost_estimate=cost,
    )(x2, pe2)

    return out2.reshape(B, S, D)


# ----------------------------------------------------------------------------- reference / test
def _reference(x: jnp.ndarray, d_model: int, scale_input: bool = True) -> jnp.ndarray:
    S = x.shape[1]
    pe = _make_pe(S, d_model)
    scale = math.sqrt(d_model) if scale_input else 1.0
    return x.astype(jnp.float32) * scale + pe[None, :, :]


if __name__ == "__main__":
    # Case 1: small shape matching the module's batch_first=True convention: [B, S, D].
    B, S, D = 2, 8, 32
    x = jax.random.randint(jax.random.PRNGKey(0), (B, S, D),
                           minval=-3, maxval=4, dtype=jnp.int32)
    out = jax.block_until_ready(positional_encoding_1d(x, d_model=D, max_len=5000))
    ref = _reference(x, D)
    assert out.shape == (B, S, D) and out.dtype == jnp.float32
    assert jnp.allclose(out, ref, atol=1e-5, rtol=1e-5)

    # Case 2: exercises balanced K tiling (K=4800 -> 1280-wide tiles), full-B batch
    # tile (tb=12, no masked tail rows) and a >=4-step grid for v7x megacore.
    B2, S2, D2 = 12, 100, 48
    x2 = jax.random.randint(jax.random.PRNGKey(1), (B2, S2, D2),
                            minval=-3, maxval=4, dtype=jnp.int32)
    out2 = jax.block_until_ready(positional_encoding_1d(x2, d_model=D2, max_len=5000))
    ref2 = _reference(x2, D2)
    assert out2.shape == (B2, S2, D2)
    assert jnp.allclose(out2, ref2, atol=1e-4, rtol=1e-5)

    # Case 3: optional bf16 output (halves the HBM write stream for bandwidth-bound use).
    out3 = jax.block_until_ready(
        positional_encoding_1d(x2, d_model=D2, out_dtype=jnp.bfloat16))
    assert out3.shape == (B2, S2, D2) and out3.dtype == jnp.bfloat16
    assert jnp.allclose(out3.astype(jnp.float32), ref2, atol=0.25, rtol=2e-2)

    print("KERNEL_OK")
</pallas_src>

<mosaic_0001>
module attributes {stable_mosaic.version = 11 : i64} {
  func.func @_pe_kernel(%arg0: i32, %arg1: i32, %arg2: memref<2x128xi32, #tpu.memory_space<vmem>>, %arg3: memref<1x128xf32, #tpu.memory_space<vmem>>, %arg4: memref<2x128xf32, #tpu.memory_space<vmem>>) attributes {dimension_semantics = [#tpu.dimension_semantics<parallel>, #tpu.dimension_semantics<parallel>], iteration_bounds = array<i64: 2, 1>, scalar_prefetch = 0 : i64, scratch_operands = 0 : i64, tpu.core_type = #tpu.core_type<tc>, window_params = [{transform_indices = @transform_0, window_bounds = array<i64: 2, 128>}, {transform_indices = @transform_1, window_bounds = array<i64: 1, 128>}, {transform_indices = @transform_2, window_bounds = array<i64: 2, 128>}]} {
    %c0 = arith.constant 0 : index
    %c0_0 = arith.constant 0 : index
    %0 = vector.load %arg2[%c0, %c0_0] : memref<2x128xi32, #tpu.memory_space<vmem>>, vector<2x128xi32>
    %1 = arith.sitofp %0 : vector<2x128xi32> to vector<2x128xf32>
    %cst = arith.constant 5.65685415 : f32
    %2 = vector.broadcast %cst : f32 to vector<2x128xf32>
    %3 = arith.mulf %1, %2 : vector<2x128xf32>
    %c0_1 = arith.constant 0 : index
    %c0_2 = arith.constant 0 : index
    %4 = vector.load %arg3[%c0_1, %c0_2] : memref<1x128xf32, #tpu.memory_space<vmem>>, vector<1x128xf32>
    %5 = vector.broadcast %4 : vector<1x128xf32> to vector<2x128xf32>
    %6 = arith.addf %3, %5 : vector<2x128xf32>
    %c0_3 = arith.constant 0 : index
    %c0_4 = arith.constant 0 : index
    %7 = vector.load %arg4[%c0_3, %c0_4] : memref<2x128xf32, #tpu.memory_space<vmem>>, vector<2x128xf32>
    tpu.vector_store %arg4[%c0_3, %c0_4], %6 {strides = array<i32>} : memref<2x128xf32, #tpu.memory_space<vmem>>, vector<2x128xf32>,
    return
  }
  func.func @transform_0(%arg0: i32, %arg1: i32) -> (i32, i32) {
    %c0_i32 = arith.constant 0 : i32
    return %arg1, %arg0 : i32, i32
  }
  func.func @transform_1(%arg0: i32, %arg1: i32) -> (i32, i32) {
    %c0_i32 = arith.constant 0 : i32
    %c0_i32_0 = arith.constant 0 : i32
    return %c0_i32, %arg0 : i32, i32
  }
  func.func @transform_2(%arg0: i32, %arg1: i32) -> (i32, i32) {
    %c0_i32 = arith.constant 0 : i32
    return %arg1, %arg0 : i32, i32
  }
}

</mosaic_0001>

<llo_original>
// kernel: positional_encoding_1d.1
$region0: #{positional_encoding_1d.1}
  #allocation0 [shape = 'u32[]', space=smem, size = 0x4, offset = 0x4, fixed_abs, tag = 'smem constant byte address 0x4 - core index']
  #allocation1 [shape = 'u32[144,128]{1,0:T(1,128)}', space=vmem, size = 0x12000, scoped, tag = 'internal scratch']
  %s0 = inlined_call_operand.vmem [shape: s32[2,256], index: 0, kind: input, shape index: {}]
  %s1 = inlined_call_operand.vmem [shape: f32[1,256], index: 1, kind: input, shape index: {}]
  %s2 = inlined_call_operand.vmem [shape: f32[2,256], index: 2, kind: output, shape index: {}]
  %s3 = sld [smem:[#allocation0]]
  $region41: #{positional_encoding_1d.1} parent=0
    _
  %s5 = ssub.s32 1, %s3
  %s6 = scalar_select 0, %s5, %s3
  loop: start=0, step=1, limit=4
  $region2: #{positional_encoding_1d.1} parent=0 // loop_pre_header
    _
  $region3: #{positional_encoding_1d.1} parent=0 // loop_header
    %s8 = sphi 0, %s12
    %p9 = scmp.ge.s32.totalorder %s8, 4
    %s15 = sphi 0, %s27
    %s16 = sphi 0, %s23
    %s17 = sphi 0, %s15
    %s18 = sphi 0, %s16
    %s19 = sphi 0, %s17
    %s20 = sphi 0, %s18
    %s32 = sphi 0, %s34
    %s35 = sphi 0, %s32
    %s36 = sphi 0, %s35
    %s52 = sphi 0, %s36
    %s58 = sphi 0, %s60
    %s61 = sphi 0, %s58
    %s62 = sphi 0, %s61
    %s78 = sphi 0, %s62
    %s86 = sphi 0, %s88
    %s89 = sphi 0, %s86
    %s90 = sphi 0, %s89
    %s106 = sphi 0, %s90
  $region4: #{positional_encoding_1d.1} parent=0 // loop_header_branch
    %11 = sbr.rel (%p9) target = $region8
  $region5: #{positional_encoding_1d.1} parent=0 // loop_body
    %s13 = ssub.s32 %s8, 1
    %s14 = ssub.s32 %s8, 2
    %s21 = sadd.s32 1, %s16
    %p22 = scmp.ge.s32.totalorder %s21, 1
    %s23 = scalar_select %p22, 0, %s21
    %s24 = sadd.s32 1, %s15
    %s25 = scalar_select %p22, %s24, %s15
    %p26 = scmp.ge.s32.totalorder %s25, 2
    %s27 = scalar_select %p26, 0, %s25
    %s28 = ssub.s32 %s16, %s23
    %s29 = ssub.s32 %s15, %s27
    %s30 = sor.u32 %s28, %s29
    %p31 = scmp.eq.s32.totalorder %s30, 0
    %s33 = sadd.s32 %s32, 1
    %s34 = scalar_select %p31, %s32, %s33
    %p37 = pneg %p31
    %p38 = scmp.eq.s32.totalorder %s8, 1
    %p39 = por %p37, %p38
    %p40 = scmp.ne.s32.totalorder %s32, %s35
    %p41 = scmp.eq.s32.totalorder %s8, 0
    %p42 = por %p40, %p41
    %p43 = scmp.ne.s32.totalorder %s32, %s35
    %p44 = scmp.eq.s32.totalorder %s13, 1
    %p45 = por %p43, %p44
    %p46 = scmp.ne.s32.totalorder %s35, %s36
    %p47 = scmp.eq.s32.totalorder %s13, 0
    %p48 = por %p46, %p47
    %p49 = scmp.ne.s32.totalorder %s35, %s36
    %p50 = scmp.eq.s32.totalorder %s14, 1
    %p51 = por %p49, %p50
    %p53 = scmp.ne.s32.totalorder %s36, %s52
    %p54 = scmp.eq.s32.totalorder %s14, 0
    %p55 = por %p53, %p54
    %s56 = ssub.s32 %s15, %s27
    %p57 = scmp.eq.s32.totalorder %s56, 0
    %s59 = sadd.s32 %s58, 1
    %s60 = scalar_select %p57, %s58, %s59
    %p63 = pneg %p57
    %p64 = scmp.eq.s32.totalorder %s8, 1
    %p65 = por %p63, %p64
    %p66 = scmp.ne.s32.totalorder %s58, %s61
    %p67 = scmp.eq.s32.totalorder %s8, 0
    %p68 = por %p66, %p67
    %p69 = scmp.ne.s32.totalorder %s58, %s61
    %p70 = scmp.eq.s32.totalorder %s13, 1
    %p71 = por %p69, %p70
    %p72 = scmp.ne.s32.totalorder %s61, %s62
    %p73 = scmp.eq.s32.totalorder %s13, 0
    %p74 = por %p72, %p73
    %p75 = scmp.ne.s32.totalorder %s61, %s62
    %p76 = scmp.eq.s32.totalorder %s14, 1
    %p77 = por %p75, %p76
    %p79 = scmp.ne.s32.totalorder %s62, %s78
    %p80 = scmp.eq.s32.totalorder %s14, 0
    %p81 = por %p79, %p80
    %s82 = ssub.s32 %s16, %s23
    %s83 = ssub.s32 %s15, %s27
    %s84 = sor.u32 %s82, %s83
    %p85 = scmp.eq.s32.totalorder %s84, 0
    %s87 = sadd.s32 %s86, 1
    %s88 = scalar_select %p85, %s86, %s87
    %p91 = pneg %p85
    %p92 = scmp.eq.s32.totalorder %s8, 1
    %p93 = por %p91, %p92
    %p94 = scmp.ne.s32.totalorder %s86, %s89
    %p95 = scmp.eq.s32.totalorder %s8, 0
    %p96 = por %p94, %p95
    %p97 = scmp.ne.s32.totalorder %s86, %s89
    %p98 = scmp.eq.s32.totalorder %s13, 1
    %p99 = por %p97, %p98
    %p100 = scmp.ne.s32.totalorder %s89, %s90
    %p101 = scmp.eq.s32.totalorder %s13, 0
    %p102 = por %p100, %p101
    %p103 = scmp.ne.s32.totalorder %s89, %s90
    %p104 = scmp.eq.s32.totalorder %s14, 1
    %p105 = por %p103, %p104
    %p107 = scmp.ne.s32.totalorder %s90, %s106
    %p108 = scmp.eq.s32.totalorder %s14, 0
    %p109 = por %p107, %p108
    %p110 = scmp.le.s32.totalorder 1, %s8
    %p111 = scmp.lt.s32.totalorder %s8, 3
    %p112 = pnand %p110, %p111
    %p113 = pneg %p112
    // Predicated region
    $region9: #{positional_encoding_1d.1} parent=5 // pred_check
      _
    $region10: #{positional_encoding_1d.1} parent=5 // pred_check_branch
      %115 = sbr.rel (%p112) target = $region12
    $region11: #{positional_encoding_1d.1} parent=5 // pred_region
      %s116 = ssub.s32 %s8, 1
    $region12: #{positional_encoding_1d.1} parent=5 // pred_fallthru
      _
    %p117 = scmp.lt.s32.totalorder %s8, 2
    // Predicated region
    $region13: #{positional_encoding_1d.1} parent=5 // pred_check
      %p118 = pneg %p117
    $region14: #{positional_encoding_1d.1} parent=5 // pred_check_branch
      %120 = sbr.rel (%p118) target = $region16
    $region15: #{positional_encoding_1d.1} parent=5 // pred_region
      // Predicated region
      $region17: #{positional_encoding_1d.1} parent=15 // pred_check
        %p121 = pneg %p42
      $region18: #{positional_encoding_1d.1} parent=15 // pred_check_branch
        %123 = sbr.rel (%p121) target = $region20
      $region19: #{positional_encoding_1d.1} parent=15 // pred_region
        %p124 = scmp.lt.s32.totalorder %s16, 0
        %s125 = scalar_select %p124, %s16, 0
        %p126 = scmp.lt.s32.totalorder %s15, 1
        %s127 = scalar_select %p126, %s15, 1
        %s128 = smul.addr %s125, 2
        %s129 = sadd.s32 %s127, %s128
        %s130 = smul.addr %s129, 2
        %s131 = scalar_lea.vmem %s0, %s130
      $region20: #{positional_encoding_1d.1} parent=15 // pred_fallthru
        _
      // Predicated region
      $region21: #{positional_encoding_1d.1} parent=15 // pred_check
        %p132 = pneg %p68
      $region22: #{positional_encoding_1d.1} parent=15 // pred_check_branch
        %134 = sbr.rel (%p132) target = $region24
      $region23: #{positional_encoding_1d.1} parent=15 // pred_region
        %p135 = scmp.lt.s32.totalorder %s15, 1
        %s136 = scalar_select %p135, %s15, 1
        %s137 = scalar_lea.vmem %s1, %s136
      $region24: #{positional_encoding_1d.1} parent=15 // pred_fallthru
        _
    $region16: #{positional_encoding_1d.1} parent=5 // pred_fallthru
      _
    %p138 = scmp.le.s32.totalorder 1, %s8
    %p139 = scmp.lt.s32.totalorder %s8, 3
    %p140 = pnand %p138, %p139
    %p141 = pneg %p140
    // Predicated region
    $region25: #{positional_encoding_1d.1} parent=5 // pred_check
      _
    $region26: #{positional_encoding_1d.1} parent=5 // pred_check_branch
      %143 = sbr.rel (%p140) target = $region28
    $region27: #{positional_encoding_1d.1} parent=5 // pred_region
      %s144 = ssub.s32 %s8, 1
      %p145 = scmp.lt.s32.totalorder %s18, 0
      %s146 = scalar_select %p145, %s18, 0
      %p147 = scmp.lt.s32.totalorder %s17, 1
      %s148 = scalar_select %p147, %s17, 1
      %s149 = smul.addr %s146, 2
      %s150 = sadd.s32 %s148, %s149
      %s151 = smul.addr %s150, 2
      %s152 = scalar_lea.vmem %s0, %s151
      %p153 = pneg %p48
      %p154 = pneg %p45
      %p155 = scmp.lt.s32.totalorder %s17, 1
      %s156 = scalar_select %p155, %s17, 1
      %s157 = scalar_lea.vmem %s1, %s156
      %p158 = pneg %p74
      %p159 = pneg %p71
      %p160 = pneg %p102
      %p161 = pneg %p99
      %p162 = scmp.lt.s32.totalorder %s18, 0
      %s163 = scalar_select %p162, %s18, 0
      %p164 = scmp.lt.s32.totalorder %s17, 1
      %s165 = scalar_select %p164, %s17, 1
      %s166 = smul.addr %s163, 2
      %s167 = sadd.s32 %s165, %s166
      %s168 = smul.addr %s167, 2
      %s169 = scalar_lea.vmem %s2, %s168
      %p170 = scmp.lt.s32.totalorder %s18, 0
      %s171 = scalar_select %p170, %s18, 0
      %p172 = scmp.lt.s32.totalorder %s17, 1
      %s173 = scalar_select %p172, %s17, 1
      %s174 = smul.addr %s171, 2
      %s175 = sadd.s32 %s173, %s174
      %s176 = smul.addr %s175, 2
      %s177 = scalar_lea.vmem %s0, %s176
      %p178 = scmp.lt.s32.totalorder %s17, 1
      %s179 = scalar_select %p178, %s17, 1
      %s180 = scalar_lea.vmem %s1, %s179
      %p181 = scmp.lt.s32.totalorder %s18, 0
      %s182 = scalar_select %p181, %s18, 0
      %p183 = scmp.lt.s32.totalorder %s17, 1
      %s184 = scalar_select %p183, %s17, 1
      %s185 = smul.addr %s182, 2
      %s186 = sadd.s32 %s184, %s185
      %s187 = smul.addr %s186, 2
      %s188 = scalar_lea.vmem %s2, %s187
      %v189 = vld [vmem:[%s177] sm:$0x3]
      %v190 = vcvt.s32.f32 %v189
      %v191 = vmul.f32 %v190, 5.656854
      %v192 = vld [vmem:[%s180] sm:$0x1]
      %v194 = vlaneseq
      %v195 = vshrl.u32 %v194, 7
      %v196 = vsub.s32 0, %v195
      %v197 = vrot.slane %v192, %v196
      %v199 = vadd.f32 %v191, %v197
      %200 = vst [vmem:[%s188] sm:$0x3] %v199
      %p201 = scmp.lt.s32.totalorder %s18, 0
      %s202 = scalar_select %p201, %s18, 0
      %p203 = scmp.lt.s32.totalorder %s17, 1
      %s204 = scalar_select %p203, %s17, 1
      %s205 = smul.addr %s202, 2
      %s206 = sadd.s32 %s204, %s205
      %s207 = smul.addr %s206, 2
      %s208 = scalar_lea.vmem %s2, %s207
      // Predicated region
      $region29: #{positional_encoding_1d.1} parent=27 // pred_check
        %p209 = pneg %p99
      $region30: #{positional_encoding_1d.1} parent=27 // pred_check_branch
        %211 = sbr.rel (%p209) target = $region32
      $region31: #{positional_encoding_1d.1} parent=27 // pred_region
        _
      $region32: #{positional_encoding_1d.1} parent=27 // pred_fallthru
        _
    $region28: #{positional_encoding_1d.1} parent=5 // pred_fallthru
      _
    %p212 = scmp.le.s32.totalorder 2, %s8
    // Predicated region
    $region33: #{positional_encoding_1d.1} parent=5 // pred_check
      %p213 = pneg %p212
    $region34: #{positional_encoding_1d.1} parent=5 // pred_check_branch
      %215 = sbr.rel (%p213) target = $region36
    $region35: #{positional_encoding_1d.1} parent=5 // pred_region
      %s216 = ssub.s32 %s8, 2
      // Predicated region
      $region37: #{positional_encoding_1d.1} parent=35 // pred_check
        %p217 = pneg %p105
      $region38: #{positional_encoding_1d.1} parent=35 // pred_check_branch
        %219 = sbr.rel (%p217) target = $region40
      $region39: #{positional_encoding_1d.1} parent=35 // pred_region
        %p220 = scmp.lt.s32.totalorder %s20, 0
        %s221 = scalar_select %p220, %s20, 0
        %p222 = scmp.lt.s32.totalorder %s19, 1
        %s223 = scalar_select %p222, %s19, 1
        %s224 = smul.addr %s221, 2
        %s225 = sadd.s32 %s223, %s224
        %s226 = smul.addr %s225, 2
        %s227 = scalar_lea.vmem %s2, %s226
      $region40: #{positional_encoding_1d.1} parent=35 // pred_fallthru
        _
    $region36: #{positional_encoding_1d.1} parent=5 // pred_fallthru
      _
  $region6: #{positional_encoding_1d.1} parent=0 // loop_footer
    %s12 = sadd.s32 1, %s8
  $region7: #{positional_encoding_1d.1} parent=0 // loop_footer_branch
    %7 = sbr.rel target = $region3
  $region8: #{positional_encoding_1d.1} parent=0 // loop_exit
    _

</llo_original>
